<compile_context>
chip_gen: v7x
topology: tpu7x:2x2x1
jax: 0.10.0
libtpu: 0.0.40
codegen_flags: <defaults>
</compile_context>

<pallas_src>
import jax
import jax.numpy as jnp
from jax.experimental import pallas as pl
from jax.experimental.pallas import tpu as pltpu

B, D = 8, 32
N_AU = 12
N_INT = 5          # number of AU-intensity heads (length of the forward() loop)
C = 6              # intensity classes per head
TASK_NUM = 5       # size of log_sigmas (original code indexes [0] and [i])
NIC = N_INT * C    # 30
NTOT = N_AU + NIC  # 42


def _softplus(x):
    # numerically stable softplus for the BCE-with-logits terms
    return jnp.maximum(x, 0.0) + jnp.log1p(jnp.exp(-jnp.abs(x)))


def multitask_loss_kernel(data_ref, w_all_ref, coef_ref, reg_ref, out_ref):
    data = data_ref[...]                       # (B, D)
    w_all = w_all_ref[...]                     # (D, NTOT)

    # ---- one fused MXU dot for the AU head + all N_INT intensity heads ----
    logits = jnp.dot(data, w_all, preferred_element_type=jnp.float32)  # (B, NTOT)

    # ---- BCEWithLogits terms on the full (unsliced) 42-lane row ----
    # (their coefficients are zero on the intensity lanes)
    sp_pos = _softplus(logits)                 # -log(1 - sigmoid(x))
    sp_neg = _softplus(-logits)                # -log(sigmoid(x))

    # ---- per-head (segmented) softmax, also on the unsliced 42-lane row ----
    # Lane mask + segment matrix are built in-kernel from iotas (no DMA'd
    # constants).  head(l) = floor(l/C); AU lanes form their own harmless
    # segments whose results are multiplied by zero coefficients.
    col = jax.lax.broadcasted_iota(jnp.int32, (B, NTOT), 1)
    is_int = col >= N_AU                                            # intensity lanes
    r = jax.lax.broadcasted_iota(jnp.int32, (NTOT, NTOT), 0).astype(jnp.float32)
    c = jax.lax.broadcasted_iota(jnp.int32, (NTOT, NTOT), 1).astype(jnp.float32)
    inv_c = jnp.float32(1.0 / C)
    segb = (jnp.floor(r * inv_c) == jnp.floor(c * inv_c)).astype(jnp.float32)

    # stabilizer = row max over the intensity lanes only (AU lanes masked out)
    m = jnp.max(jnp.where(is_int, logits, -1e30), axis=-1, keepdims=True)   # (B,1)
    z = jnp.exp(jnp.where(is_int, logits - m, 0.0))                         # (B,NTOT)
    # block-diagonal ones broadcast each segment's sum-of-exp back to its lanes
    sumz = jnp.dot(z, segb, preferred_element_type=jnp.float32)             # (B,NTOT)
    # Clamp: with a shared (cross-head) stabilizer, a head whose logits sit
    # ~87+ below the row max could underflow to sumz=0 -> log(0) -> NaN.
    sumz = jnp.maximum(sumz, 1e-30)
    neg_log_prob = (m + jnp.log(sumz)) - logits                             # (B,NTOT)

    # coefficient slabs (labels / class weights / uncertainty precisions only,
    # fused host-side; leading-axis indexing is a free sublane-offset view):
    #   [0] AU lanes: prec_AU/(B*N_AU) * cw_AU * AUs       ; intensity lanes: 0
    #   [1] AU lanes: prec_AU/(B*N_AU) * (1 - AUs)         ; intensity lanes: 0
    #   [2] AU lanes: 0 ; intensity lanes: prec_i * onehot*w / sum_b w[label_b]
    cA = coef_ref[0]
    cB = coef_ref[1]
    cC = coef_ref[2]
    weighted = jnp.sum(cA * sp_neg + cB * sp_pos + cC * neg_log_prob)

    # + sum of log_sigma regularizers (precomputed from parameters, SMEM scalar)
    out_ref[0, 0] = weighted + reg_ref[0]


@jax.jit
def multitask_loss(data, w_au, w_int, aus, labels, cw_au, cw_int, log_sigmas):
    # --- host-side layout / label / parameter plumbing only (no model compute) ---
    ls = log_sigmas                                   # (TASK_NUM,)
    prec = 0.5 * jnp.exp(-2.0 * ls)                   # uncertainty precisions

    # fused head weight: (D, NTOT); intensity head i at columns N_AU + [i*C,(i+1)*C)
    w_int_2d = jnp.transpose(w_int, (1, 0, 2)).reshape(D, NIC)
    w_all = jnp.concatenate([w_au, w_int_2d], axis=1)

    # BCE coefficient slabs (zero on the intensity lanes)
    scale_au = prec[0] * (1.0 / (B * N_AU))
    zpad = jnp.zeros((B, NIC), jnp.float32)
    coefA = jnp.concatenate([scale_au * cw_au * aus, zpad], axis=1)
    coefB = jnp.concatenate([scale_au * (1.0 - aus), zpad], axis=1)

    # weighted-CE coefficient slab (zero on the AU lanes):
    #   one_hot(label) * class_weight / sum_b class_weight[label_b]  * prec_i
    one_hot = jax.nn.one_hot(labels, C, dtype=jnp.float32)        # (B, N_INT, C)
    ohw = one_hot * cw_int[None, :, :]
    den = jnp.sum(ohw, axis=(0, 2), keepdims=True)                # sum_b w[label_b] per head
    ohwn = (ohw / den) * prec[:N_INT][None, :, None]
    coefC = jnp.concatenate([jnp.zeros((B, N_AU), jnp.float32),
                             ohwn.reshape(B, NIC)], axis=1)

    coefs = jnp.stack([coefA, coefB, coefC], axis=0)              # (3, B, NTOT): one DMA

    # +log_sigma regularizers.  log_sigmas[0] is applied to both the AU loss and
    # intensity head 0 — faithfully mirrors the PyTorch source (upstream quirk).
    reg = jnp.reshape(ls[0] + jnp.sum(ls[:N_INT]), (1,))

    # NOTE: the original forward computes num_labs = np.count_nonzero(...) but
    # never uses it; it is dropped here to avoid a device->host sync per call.

    vmem = pltpu.MemorySpace.VMEM
    smem = pltpu.MemorySpace.SMEM
    flops = 2 * B * D * NTOT + 2 * B * NTOT * NTOT + 16 * B * NTOT
    bytes_accessed = 4 * (B * D + D * NTOT + 3 * B * NTOT + 1 + 1)
    out = pl.pallas_call(
        multitask_loss_kernel,
        out_shape=jax.ShapeDtypeStruct((1, 1), jnp.float32),
        in_specs=[pl.BlockSpec(memory_space=vmem)] * 3
                 + [pl.BlockSpec(memory_space=smem)],
        out_specs=pl.BlockSpec(memory_space=smem),
        cost_estimate=pl.CostEstimate(flops=flops,
                                      transcendentals=6 * B * NTOT,
                                      bytes_accessed=bytes_accessed),
    )(data, w_all, coefs, reg)

    # mirrors `return (loss_collect, self.log_sigmas.data.tolist())`, but keeps
    # log_sigmas on-device (no host round-trip, wrapper stays jittable).
    return out[0, 0], ls


def reference_loss(data, w_au, w_int, aus, labels, cw_au, cw_int, log_sigmas):
    ls = log_sigmas
    logits_au = data @ w_au
    au_loss = jnp.mean(-(cw_au * aus * jax.nn.log_sigmoid(logits_au)
                         + (1.0 - aus) * jax.nn.log_sigmoid(-logits_au)))
    loss = 0.5 * jnp.exp(-2.0 * ls[0]) * au_loss + ls[0]
    for i in range(N_INT):
        logp = jax.nn.log_softmax(data @ w_int[i], axis=-1)
        lab = labels[:, i]
        nll = -jnp.take_along_axis(logp, lab[:, None], axis=-1)[:, 0]
        w = cw_int[i][lab]
        ce = jnp.sum(w * nll) / jnp.sum(w)
        loss = loss + 0.5 * jnp.exp(-2.0 * ls[i]) * ce + ls[i]
    return loss


if __name__ == "__main__":
    key = jax.random.PRNGKey(0)
    k = jax.random.split(key, 5)
    data = jax.random.normal(k[0], (B, D), jnp.float32)
    w_au = 0.1 * jax.random.normal(k[1], (D, N_AU), jnp.float32)
    w_int = 0.1 * jax.random.normal(k[2], (N_INT, D, C), jnp.float32)
    aus = jax.random.bernoulli(k[3], 0.3, (B, N_AU)).astype(jnp.float32)
    labels = jax.random.randint(k[4], (B, N_INT), 0, C, jnp.int32)

    cw_au = (1.0 + 0.1 * jnp.arange(N_AU, dtype=jnp.float32)).reshape(1, N_AU)
    cw_int = (1.0 + 0.05 * jnp.arange(N_INT * C, dtype=jnp.float32)).reshape(N_INT, C)
    log_sigmas = jnp.ones((TASK_NUM,), jnp.float32)   # torch.ones(task_num)

    loss, sigmas = multitask_loss(data, w_au, w_int, aus, labels,
                                  cw_au, cw_int, log_sigmas)
    loss = jax.block_until_ready(loss)

    ref = reference_loss(data, w_au, w_int, aus, labels, cw_au, cw_int, log_sigmas)
    assert abs(float(loss) - float(ref)) < 1e-3, (float(loss), float(ref))
    assert sigmas.shape == (TASK_NUM,)
    print("KERNEL_OK")
</pallas_src>

<mosaic_0001>
module attributes {stable_mosaic.version = 11 : i64} {
  func.func @multitask_loss_kernel(%arg0: memref<8x32xf32, #tpu.memory_space<vmem>>, %arg1: memref<32x42xf32, #tpu.memory_space<vmem>>, %arg2: memref<3x8x42xf32, #tpu.memory_space<vmem>>, %arg3: memref<1xf32, #tpu.memory_space<smem>>, %arg4: memref<1x1xf32, #tpu.memory_space<smem>>) attributes {dimension_semantics = [], scalar_prefetch = 0 : i64, scratch_operands = 0 : i64, tpu.core_type = #tpu.core_type<tc>} {
    %c0 = arith.constant 0 : index
    %c0_0 = arith.constant 0 : index
    %0 = vector.load %arg0[%c0, %c0_0] : memref<8x32xf32, #tpu.memory_space<vmem>>, vector<8x32xf32>
    %c0_1 = arith.constant 0 : index
    %c0_2 = arith.constant 0 : index
    %1 = vector.load %arg1[%c0_1, %c0_2] : memref<32x42xf32, #tpu.memory_space<vmem>>, vector<32x42xf32>
    %cst = arith.constant dense<0.000000e+00> : vector<8x42xf32>
    %2 = tpu.matmul %0, %1, %cst {dimension_numbers = #tpu.dot_dimension_numbers<[1], [0], [0], [1], [0, 0, 1, 1], [], []>} : vector<8x32xf32>, vector<32x42xf32>, vector<8x42xf32> -> vector<8x42xf32>
    %cst_3 = arith.constant 0.000000e+00 : f32
    %3 = vector.broadcast %cst_3 : f32 to vector<8x42xf32>
    %4 = arith.maximumf %2, %3 : vector<8x42xf32>
    %5 = math.absf %2 : vector<8x42xf32>
    %cst_4 = arith.constant 0.000000e+00 : f32
    %6 = vector.broadcast %cst_4 : f32 to vector<8x42xf32>
    %7 = arith.subf %6, %5 : vector<8x42xf32>
    %8 = math.exp %7 : vector<8x42xf32>
    %9 = math.log1p %8 : vector<8x42xf32>
    %10 = arith.addf %4, %9 : vector<8x42xf32>
    %cst_5 = arith.constant 0.000000e+00 : f32
    %11 = vector.broadcast %cst_5 : f32 to vector<8x42xf32>
    %12 = arith.subf %11, %2 : vector<8x42xf32>
    %cst_6 = arith.constant 0.000000e+00 : f32
    %13 = vector.broadcast %cst_6 : f32 to vector<8x42xf32>
    %14 = arith.maximumf %12, %13 : vector<8x42xf32>
    %15 = math.absf %12 : vector<8x42xf32>
    %cst_7 = arith.constant 0.000000e+00 : f32
    %16 = vector.broadcast %cst_7 : f32 to vector<8x42xf32>
    %17 = arith.subf %16, %15 : vector<8x42xf32>
    %18 = math.exp %17 : vector<8x42xf32>
    %19 = math.log1p %18 : vector<8x42xf32>
    %20 = arith.addf %14, %19 : vector<8x42xf32>
    %21 = tpu.iota {dimensions = array<i32: 1>} : vector<8x42xi32>
    %c12_i32 = arith.constant 12 : i32
    %22 = vector.broadcast %c12_i32 : i32 to vector<8x42xi32>
    %23 = arith.cmpi sge, %21, %22 : vector<8x42xi32>
    %24 = tpu.iota {dimensions = array<i32: 0>} : vector<42x42xi32>
    %25 = arith.sitofp %24 : vector<42x42xi32> to vector<42x42xf32>
    %26 = tpu.iota {dimensions = array<i32: 1>} : vector<42x42xi32>
    %27 = arith.sitofp %26 : vector<42x42xi32> to vector<42x42xf32>
    %cst_8 = arith.constant 0.166666672 : f32
    %28 = vector.broadcast %cst_8 : f32 to vector<42x42xf32>
    %29 = arith.mulf %25, %28 : vector<42x42xf32>
    %30 = math.floor %29 : vector<42x42xf32>
    %cst_9 = arith.constant 0.166666672 : f32
    %31 = vector.broadcast %cst_9 : f32 to vector<42x42xf32>
    %32 = arith.mulf %27, %31 : vector<42x42xf32>
    %33 = math.floor %32 : vector<42x42xf32>
    %34 = arith.cmpf oeq, %30, %33 : vector<42x42xf32>
    %35 = arith.extui %34 : vector<42x42xi1> to vector<42x42xi32>
    %36 = arith.sitofp %35 : vector<42x42xi32> to vector<42x42xf32>
    %cst_10 = arith.constant -1.000000e+30 : f32
    %37 = vector.broadcast %cst_10 : f32 to vector<8x42xf32>
    %38 = arith.select %23, %2, %37 : vector<8x42xi1>, vector<8x42xf32>
    %cst_11 = arith.constant dense<0xFF800000> : vector<8xf32>
    %39 = vector.multi_reduction <maximumf>, %38, %cst_11 [1] : vector<8x42xf32> to vector<8xf32>
    %40 = vector.shape_cast %39 : vector<8xf32> to vector<8x1xf32>
    %41 = vector.broadcast %40 : vector<8x1xf32> to vector<8x42xf32>
    %42 = arith.subf %2, %41 : vector<8x42xf32>
    %cst_12 = arith.constant 0.000000e+00 : f32
    %43 = vector.broadcast %cst_12 : f32 to vector<8x42xf32>
    %44 = arith.select %23, %42, %43 : vector<8x42xi1>, vector<8x42xf32>
    %45 = math.exp %44 : vector<8x42xf32>
    %cst_13 = arith.constant dense<0.000000e+00> : vector<8x42xf32>
    %46 = tpu.matmul %45, %36, %cst_13 {dimension_numbers = #tpu.dot_dimension_numbers<[1], [0], [0], [1], [0, 0, 1, 1], [], []>} : vector<8x42xf32>, vector<42x42xf32>, vector<8x42xf32> -> vector<8x42xf32>
    %cst_14 = arith.constant 1.000000e-30 : f32
    %47 = vector.broadcast %cst_14 : f32 to vector<8x42xf32>
    %48 = arith.maximumf %46, %47 : vector<8x42xf32>
    %49 = math.log %48 : vector<8x42xf32>
    %50 = vector.broadcast %40 : vector<8x1xf32> to vector<8x42xf32>
    %51 = arith.addf %50, %49 : vector<8x42xf32>
    %52 = arith.subf %51, %2 : vector<8x42xf32>
    %c0_15 = arith.constant 0 : index
    %c0_16 = arith.constant 0 : index
    %c0_17 = arith.constant 0 : index
    %53 = vector.load %arg2[%c0_15, %c0_16, %c0_17] : memref<3x8x42xf32, #tpu.memory_space<vmem>>, vector<1x8x42xf32>
    %54 = vector.shape_cast %53 : vector<1x8x42xf32> to vector<8x42xf32>
    %c1 = arith.constant 1 : index
    %c0_18 = arith.constant 0 : index
    %c0_19 = arith.constant 0 : index
    %55 = vector.load %arg2[%c1, %c0_18, %c0_19] : memref<3x8x42xf32, #tpu.memory_space<vmem>>, vector<1x8x42xf32>
    %56 = vector.shape_cast %55 : vector<1x8x42xf32> to vector<8x42xf32>
    %c2 = arith.constant 2 : index
    %c0_20 = arith.constant 0 : index
    %c0_21 = arith.constant 0 : index
    %57 = vector.load %arg2[%c2, %c0_20, %c0_21] : memref<3x8x42xf32, #tpu.memory_space<vmem>>, vector<1x8x42xf32>
    %58 = vector.shape_cast %57 : vector<1x8x42xf32> to vector<8x42xf32>
    %59 = arith.mulf %54, %20 : vector<8x42xf32>
    %60 = arith.mulf %56, %10 : vector<8x42xf32>
    %61 = arith.addf %59, %60 : vector<8x42xf32>
    %62 = arith.mulf %58, %52 : vector<8x42xf32>
    %63 = arith.addf %61, %62 : vector<8x42xf32>
    %64 = vector.shape_cast %63 : vector<8x42xf32> to vector<1x8x42xf32>
    %cst_22 = arith.constant dense<0.000000e+00> : vector<1xf32>
    %65 = vector.multi_reduction <add>, %64, %cst_22 [1, 2] : vector<1x8x42xf32> to vector<1xf32>
    %66 = vector.shape_cast %65 : vector<1xf32> to vector<1x1x1xf32>
    %67 = vector.extract %66[0, 0, 0] : f32 from vector<1x1x1xf32>
    %c0_23 = arith.constant 0 : index
    %68 = memref.load %arg3[%c0_23] : memref<1xf32, #tpu.memory_space<smem>>
    %69 = arith.addf %67, %68 : f32
    %c0_24 = arith.constant 0 : index
    %c0_25 = arith.constant 0 : index
    %70 = memref.load %arg4[%c0_24, %c0_25] : memref<1x1xf32, #tpu.memory_space<smem>>
    memref.store %69, %arg4[%c0_24, %c0_25] : memref<1x1xf32, #tpu.memory_space<smem>>
    return
  }
}

</mosaic_0001>

<llo_original>
// kernel: multitask_loss.1
$region0: #{multitask_loss.1}
  #allocation0 [shape = 'u32[]', space=smem, size = 0x4, offset = 0x4, fixed_abs, tag = 'smem constant byte address 0x4 - core index']
  #allocation1 [shape = 'u32[144,128]{1,0:T(1,128)}', space=vmem, size = 0x12000, scoped, tag = 'internal scratch']
  #allocation2 [shape = 'f32[1]{0:T(128)S(6)}', space=smem, size = 0x200, scoped, tag = 'scoped memory for multitask_loss.1']
  %s0 = inlined_call_operand.vmem [shape: f32[8,32], index: 0, kind: input, shape index: {}]
  %s1 = inlined_call_operand.vmem [shape: f32[32,42], index: 1, kind: input, shape index: {}]
  %s2 = inlined_call_operand.vmem [shape: f32[3,8,42], index: 2, kind: input, shape index: {}]
  %s3 = inlined_call_operand.<no memory space> [shape: f32[1], index: 3, kind: input, shape index: {}]
  %s4 = inlined_call_operand.hbm [shape: f32[1,1], index: 4, kind: output, shape index: {}]
  %s5 = sld [smem:[#allocation0]]
  $region26: #{multitask_loss.1} parent=0
    _
  %s7 = ssub.s32 1, %s5
  %s8 = scalar_select 0, %s7, %s5
  %9 = sst [smem:[#allocation2]] %s3
  $region1: #{multitask_loss.1} parent=0
    #allocation3 [shape = 'u8[512]{0}', space=smem, size = 0x200, scoped, tag = 'output window, operand 0, single buffered']
    #allocation4 [shape = 's32[1]{0}', space=sflag, size = 0x4, scoped, tag = 'scoped memory for multitask_loss.1']
    %10 = vsyncpa [#allocation4], 0
    // Predicated region
    $region2: #{multitask_loss.1} parent=1 // pred_check
      _
    $region3: #{multitask_loss.1} parent=1 // pred_check_branch
      %12 = sbr.rel (0) target = $region5
    $region4: #{multitask_loss.1} parent=1 // pred_region
      _
    $region5: #{multitask_loss.1} parent=1 // pred_fallthru
      _
    // Predicated region
    $region6: #{multitask_loss.1} parent=1 // pred_check
      _
    $region7: #{multitask_loss.1} parent=1 // pred_check_branch
      %14 = sbr.rel (0) target = $region9
    $region8: #{multitask_loss.1} parent=1 // pred_region
      _
    $region9: #{multitask_loss.1} parent=1 // pred_fallthru
      _
    // Predicated region
    $region10: #{multitask_loss.1} parent=1 // pred_check
      _
    $region11: #{multitask_loss.1} parent=1 // pred_check_branch
      %16 = sbr.rel (0) target = $region13
    $region12: #{multitask_loss.1} parent=1 // pred_region
      _
    $region13: #{multitask_loss.1} parent=1 // pred_fallthru
      _
    // Predicated region
    $region14: #{multitask_loss.1} parent=1 // pred_check
      _
    $region15: #{multitask_loss.1} parent=1 // pred_check_branch
      %18 = sbr.rel (0) target = $region17
    $region16: #{multitask_loss.1} parent=1 // pred_region
      _
    $region17: #{multitask_loss.1} parent=1 // pred_fallthru
      _
    %v19 = vld [vmem:[%s0] sm:$0xff]
    %v20 = vld [vmem:[%s1] sm:$0xff]
    %v21 = vld [vmem:[%s1 + $0x8] sm:$0xff]
    %v22 = vld [vmem:[%s1 + $0x10] sm:$0xff]
    %v23 = vld [vmem:[%s1 + $0x18] sm:$0xff]
    %vm24 = vcmask 261120
    %v26 = vsel %vm24, %v19, 0
    %28 = vmatprep.subr.mxu0 0.0
    %29 = vmatpush1.msra.mxu0 %v20
    %30 = vmatprep.subr.mxu0 0.0
    %31 = vmatpush1.msra.mxu0 %v21
    %32 = vmatprep.subr.mxu0 0.0
    %33 = vmatpush1.msra.mxu0 %v22
    %34 = vmatprep.subr.mxu0 0.0
    %35 = vmatpush1.msra.mxu0 %v23
    %36 = vmatprep.subr.mxu0 0.0
    %37 = vmatpush1.msra.mxu0 0.0
    %38 = vmatprep.subr.mxu0 0.0
    %39 = vmatpush1.msra.mxu0 0.0
    %40 = vmatprep.subr.mxu0 0.0
    %41 = vmatpush1.msra.mxu0 0.0
    %42 = vmatprep.subr.mxu0 0.0
    %43 = vmatpush1.msra.mxu0 0.0
    %44 = vmatprep.subr.mxu0 0.0
    %45 = vmatpush1.msra.mxu0 0.0
    %46 = vmatprep.subr.mxu0 0.0
    %47 = vmatpush1.msra.mxu0 0.0
    %48 = vmatprep.subr.mxu0 0.0
    %49 = vmatpush1.msra.mxu0 0.0
    %50 = vmatprep.subr.mxu0 0.0
    %51 = vmatpush1.msra.mxu0 0.0
    %52 = vmatprep.subr.mxu0 0.0
    %53 = vmatpush1.msra.mxu0 0.0
    %54 = vmatprep.subr.mxu0 0.0
    %55 = vmatpush1.msra.mxu0 0.0
    %56 = vmatprep.subr.mxu0 0.0
    %57 = vmatpush1.msra.mxu0 0.0
    %58 = vmatprep.subr.mxu0 0.0
    %59 = vmatpush1.msra.mxu0 0.0
    %60 = vmatprep.subr.mxu0 0.0
    %61 = vmatpush1.msra.mxu0 0.0
    %62 = vmatprep.subr.mxu0 0.0
    %63 = vmatpush1.msra.mxu0 0.0
    %64 = vmatprep.subr.mxu0 0.0
    %65 = vmatpush1.msra.mxu0 0.0
    %66 = vmatprep.subr.mxu0 0.0
    %67 = vmatpush1.msra.mxu0 0.0
    %68 = vmatprep.subr.mxu0 0.0
    %69 = vmatpush1.msra.mxu0 0.0
    %70 = vmatprep.subr.mxu0 0.0
    %71 = vmatpush1.msra.mxu0 0.0
    %72 = vmatprep.subr.mxu0 0.0
    %73 = vmatpush1.msra.mxu0 0.0
    %74 = vmatprep.subr.mxu0 0.0
    %75 = vmatpush1.msra.mxu0 0.0
    %76 = vmatprep.subr.mxu0 0.0
    %77 = vmatpush1.msra.mxu0 0.0
    %78 = vmatprep.subr.mxu0 0.0
    %79 = vmatpush1.msra.mxu0 0.0
    %80 = vmatprep.subr.mxu0 0.0
    %81 = vmatpush1.msra.mxu0 0.0
    %82 = vmatprep.subr.mxu0 0.0
    %83 = vmatpush1.msra.mxu0 0.0
    %84 = vmatprep.subr.mxu0 0.0
    %85 = vmatpush1.msra.mxu0 0.0
    %86 = vmatprep.subr.mxu0 0.0
    %87 = vmatpush1.msra.mxu0 0.0
    %88 = vmatprep.subr.mxu0 0.0
    %89 = vmatpush1.msra.mxu0 0.0
    %90 = vmatprep.subr.mxu0 0.0
    %91 = vmatpush1.msra.mxu0 0.0
    %92 = vmatprep.mubr.f32.mxu0 0.0
    %93 = vmatmul.mubr.f32.gmra.mrb[0].mxu0 %v26
    %v94 = vpop.f32.mrb[0].mxu0
    %v95 = vadd.f32 0.0, %v94
    %v96 = vpop.f32.mrb[0].mxu0
    %97 = vdwg.mxu0
    %v98 = vmax.f32 %v95, 0.0
    %v99 = vand.u32 2147483647, %v95
    %v100 = vsub.f32 0.0, %v99
    %v101 = vmul.f32 %v100, 1.442695
    %v102 = vpow.pop %v101
    %v103 = vadd.f32 %v102, 1.0
    %v104 = vlog2.pop %v103
    %v105 = vmul.f32 %v104, 0.6931472
    %v106 = vmul.f32 -0.5, %v102
    %v107 = vadd.f32 %v106, 1.0
    %v108 = vmul.f32 %v107, %v102
    %v109 = vand.u32 2147483647, %v102
    %vm110 = vcmp.lt.f32.partialorder %v109, 0.0004427343
    %v111 = vsel %vm110, %v108, %v105
    %v112 = vadd.f32 %v98, %v111
    %v113 = vsub.f32 0.0, %v95
    %v114 = vmax.f32 %v113, 0.0
    %v115 = vand.u32 2147483647, %v113
    %v116 = vsub.f32 0.0, %v115
    %v117 = vmul.f32 %v116, 1.442695
    %v118 = vpow.pop %v117
    %v119 = vadd.f32 %v118, 1.0
    %v120 = vlog2.pop %v119
    %v121 = vmul.f32 %v120, 0.6931472
    %v122 = vmul.f32 -0.5, %v118
    %v123 = vadd.f32 %v122, 1.0
    %v124 = vmul.f32 %v123, %v118
    %v125 = vand.u32 2147483647, %v118
    %vm126 = vcmp.lt.f32.partialorder %v125, 0.0004427343
    %v127 = vsel %vm126, %v124, %v121
    %v128 = vadd.f32 %v114, %v127
    %v129 = vlaneseq
    %v130 = vand.u32 %v129, 127
    %vm131 = vcmp.ge.s32.totalorder %v130, 12
    %v132 = vlaneseq
    %v133 = vshrl.u32 %v132, 7
    %v134 = vadd.s32 %v133, 8
    %v135 = vadd.s32 %v133, 16
    %v136 = vadd.s32 %v133, 24
    %v137 = vadd.s32 %v133, 32
    %v138 = vadd.s32 %v133, 40
    %v139 = vcvt.s32.f32 %v133
    %v140 = vcvt.s32.f32 %v134
    %v141 = vcvt.s32.f32 %v135
    %v142 = vcvt.s32.f32 %v136
    %v143 = vcvt.s32.f32 %v137
    %v144 = vcvt.s32.f32 %v138
    %v145 = vcvt.s32.f32 %v130
    %v146 = vmul.f32 %v139, 0.16666667
    %v147 = vmul.f32 %v140, 0.16666667
    %v148 = vmul.f32 %v141, 0.16666667
    %v149 = vmul.f32 %v142, 0.16666667
    %v150 = vmul.f32 %v143, 0.16666667
    %v151 = vmul.f32 %v144, 0.16666667
    %v152 = vfloor.f32 %v146
    %v153 = vfloor.f32 %v147
    %v154 = vfloor.f32 %v148
    %v155 = vfloor.f32 %v149
    %v156 = vfloor.f32 %v150
    %v157 = vfloor.f32 %v151
    %v158 = vmul.f32 %v145, 0.16666667
    %v159 = vfloor.f32 %v158
    %vm160 = vcmp.eq.f32.partialorder %v152, %v159
    %vm161 = vcmp.eq.f32.partialorder %v153, %v159
    %vm162 = vcmp.eq.f32.partialorder %v154, %v159
    %vm163 = vcmp.eq.f32.partialorder %v155, %v159
    %vm164 = vcmp.eq.f32.partialorder %v156, %v159
    %vm165 = vcmp.eq.f32.partialorder %v157, %v159
    %v166 = vsel %vm160, 1, 0
    %v167 = vsel %vm161, 1, 0
    %v168 = vsel %vm162, 1, 0
    %v169 = vsel %vm163, 1, 0
    %v170 = vsel %vm164, 1, 0
    %v171 = vsel %vm165, 1, 0
    %v172 = vcvt.s32.f32 %v166
    %v173 = vcvt.s32.f32 %v167
    %v174 = vcvt.s32.f32 %v168
    %v175 = vcvt.s32.f32 %v169
    %v176 = vcvt.s32.f32 %v170
    %v177 = vcvt.s32.f32 %v171
    %v178 = vsel %vm131, %v95, -1e+30
    %vm179 = vcmask 343040
    %v180 = vsel %vm179, %v178, -inf
    %181 = vmax.xlane.f32.xlu0 %v180
    %v182 = vpop.xlane.xlu0 %181
    %v183 = vsub.f32 %v95, %v182
    %v184 = vsel %vm131, %v183, 0.0
    %v185 = vmul.f32 %v184, 1.442695
    %v186 = vpow.pop %v185
    %v188 = vsel %vm179, %v186, 0
    %vm190 = vcmask 1041408
    %v192 = vsel %vm190, %v177, 0
    %194 = vmatprep.subr.mxu0 0.0
    %195 = vmatpush1.msra.mxu0 %v172
    %196 = vmatprep.subr.mxu0 0.0
    %197 = vmatpush1.msra.mxu0 %v173
    %198 = vmatprep.subr.mxu0 0.0
    %199 = vmatpush1.msra.mxu0 %v174
    %200 = vmatprep.subr.mxu0 0.0
    %201 = vmatpush1.msra.mxu0 %v175
    %202 = vmatprep.subr.mxu0 0.0
    %203 = vmatpush1.msra.mxu0 %v176
    %204 = vmatprep.subr.mxu0 0.0
    %205 = vmatpush1.msra.mxu0 %v192
    %206 = vmatprep.subr.mxu0 0.0
    %207 = vmatpush1.msra.mxu0 0.0
    %208 = vmatprep.subr.mxu0 0.0
    %209 = vmatpush1.msra.mxu0 0.0
    %210 = vmatprep.subr.mxu0 0.0
    %211 = vmatpush1.msra.mxu0 0.0
    %212 = vmatprep.subr.mxu0 0.0
    %213 = vmatpush1.msra.mxu0 0.0
    %214 = vmatprep.subr.mxu0 0.0
    %215 = vmatpush1.msra.mxu0 0.0
    %216 = vmatprep.subr.mxu0 0.0
    %217 = vmatpush1.msra.mxu0 0.0
    %218 = vmatprep.subr.mxu0 0.0
    %219 = vmatpush1.msra.mxu0 0.0
    %220 = vmatprep.subr.mxu0 0.0
    %221 = vmatpush1.msra.mxu0 0.0
    %222 = vmatprep.subr.mxu0 0.0
    %223 = vmatpush1.msra.mxu0 0.0
    %224 = vmatprep.subr.mxu0 0.0
    %225 = vmatpush1.msra.mxu0 0.0
    %226 = vmatprep.subr.mxu0 0.0
    %227 = vmatpush1.msra.mxu0 0.0
    %228 = vmatprep.subr.mxu0 0.0
    %229 = vmatpush1.msra.mxu0 0.0
    %230 = vmatprep.subr.mxu0 0.0
    %231 = vmatpush1.msra.mxu0 0.0
    %232 = vmatprep.subr.mxu0 0.0
    %233 = vmatpush1.msra.mxu0 0.0
    %234 = vmatprep.subr.mxu0 0.0
    %235 = vmatpush1.msra.mxu0 0.0
    %236 = vmatprep.subr.mxu0 0.0
    %237 = vmatpush1.msra.mxu0 0.0
    %238 = vmatprep.subr.mxu0 0.0
    %239 = vmatpush1.msra.mxu0 0.0
    %240 = vmatprep.subr.mxu0 0.0
    %241 = vmatpush1.msra.mxu0 0.0
    %242 = vmatprep.subr.mxu0 0.0
    %243 = vmatpush1.msra.mxu0 0.0
    %244 = vmatprep.subr.mxu0 0.0
    %245 = vmatpush1.msra.mxu0 0.0
    %246 = vmatprep.subr.mxu0 0.0
    %247 = vmatpush1.msra.mxu0 0.0
    %248 = vmatprep.subr.mxu0 0.0
    %249 = vmatpush1.msra.mxu0 0.0
    %250 = vmatprep.subr.mxu0 0.0
    %251 = vmatpush1.msra.mxu0 0.0
    %252 = vmatprep.subr.mxu0 0.0
    %253 = vmatpush1.msra.mxu0 0.0
    %254 = vmatprep.subr.mxu0 0.0
    %255 = vmatpush1.msra.mxu0 0.0
    %256 = vmatprep.subr.mxu0 0.0
    %257 = vmatpush1.msra.mxu0 0.0
    %258 = vmatprep.mubr.f32.mxu0 0.0
    %259 = vmatmul.mubr.f32.gmra.mrb[0].mxu0 %v188
    %v260 = vpop.f32.mrb[0].mxu0
    %v261 = vadd.f32 0.0, %v260
    %v262 = vpop.f32.mrb[0].mxu0
    %263 = vdwg.mxu0
    %v264 = vmax.f32 %v261, 1e-30
    %v265 = vlog2.pop %v264
    %v266 = vmul.f32 %v265, 0.6931472
    %v267 = vadd.f32 %v182, %v266
    %v268 = vsub.f32 %v267, %v95
    %v269 = vld [vmem:[%s2] sm:$0xff]
    %s270 = scalar_lea.vmem %s2, 8
    %v271 = vld [vmem:[%s270] sm:$0xff]
    %s272 = scalar_lea.vmem %s2, 16
    %v273 = vld [vmem:[%s272] sm:$0xff]
    %v274 = vmul.f32 %v269, %v128
    %v275 = vmul.f32 %v271, %v112
    %v276 = vadd.f32 %v274, %v275
    %v277 = vmul.f32 %v273, %v268
    %v278 = vadd.f32 %v276, %v277
    %v279 = vsel %vm179, %v278, 0.0
    %280 = vadd.xlane.f32.xlu0 %v279
    %v281 = vpop.xlane.xlu0 %280
    %v282 = vrot.slane %v281, 4
    %v283 = vadd.f32 %v281, %v282
    %v284 = vrot.slane %v283, 2
    %v285 = vadd.f32 %v283, %v284
    %v286 = vrot.slane %v285, 1
    %v287 = vadd.f32 %v285, %v286
    %s288 = vtos %v287
    %s289 = sld [smem:[#allocation2]]
    %s290 = sadd.f32 %s288, %s289
    %s291 = scalar_lea.smem [#allocation3], 0
    %292 = sst [smem:[%s291]] %s290
    // Predicated region
    $region18: #{multitask_loss.1} parent=1 // pred_check
      _
    $region19: #{multitask_loss.1} parent=1 // pred_check_branch
      %294 = sbr.rel (0) target = $region21
    $region20: #{multitask_loss.1} parent=1 // pred_region
      %s296 = ssub.s32 16, 16
      %297 = vsyncadd [#allocation4], %s296
      %300 = dma.smem_to_hbm [#allocation3], 16, %s4, [#allocation4]
    $region21: #{multitask_loss.1} parent=1 // pred_fallthru
      _
    // Predicated region
    $region22: #{multitask_loss.1} parent=1 // pred_check
      _
    $region23: #{multitask_loss.1} parent=1 // pred_check_branch
      %302 = sbr.rel (0) target = $region25
    $region24: #{multitask_loss.1} parent=1 // pred_region
      %303 = dma.done [#allocation4], 16
    $region25: #{multitask_loss.1} parent=1 // pred_fallthru
      _
    %304 = sfence
    %305 = vsyncpa [#allocation4], 1

</llo_original>
